<compile_context>
chip_gen: v7x
topology: tpu7x:2x2x1
jax: 0.10.0
libtpu: 0.0.40
codegen_flags: <defaults>
</compile_context>

<pallas_src>
import math
from functools import partial

import jax
import jax.numpy as jnp
from jax import lax
from jax.experimental import pallas as pl
from jax.experimental.pallas import tpu as pltpu


# ----------------------------------------------------------------------------- helpers
def _round_up(x, m):
    return ((x + m - 1) // m) * m


def _softplus(x):
    # numerically stable softplus built from exp/log only (Mosaic-safe)
    return jnp.maximum(x, 0.0) + jnp.log(1.0 + jnp.exp(-jnp.abs(x)))


def _silu_ref(x):
    return x / (1.0 + jnp.exp(-x))


def _silu_k(x):
    # in-kernel SiLU: divide goes to the EUP via approx reciprocal (frees VALU slots)
    return x * pl.reciprocal(1.0 + jnp.exp(-x), approx=True)


# ----------------------------------------------------------------------------- HW-aware knobs
_VMEM_LIMIT_CACHE = None


def _vmem_limit_bytes():
    """Generation-aware scoped-VMEM limit (v7x only has 64 MiB physical VMEM/TC)."""
    global _VMEM_LIMIT_CACHE
    if _VMEM_LIMIT_CACHE is None:
        limit = 48 * 1024 * 1024                       # safe on every generation
        try:
            cap = pltpu.get_tpu_info().vmem_capacity_bytes
            # ~51 MiB on v7x (64 MiB), ~102 MiB on v5e/v6e (128 MiB), capped at 112 MiB
            limit = int(min(cap * 4 // 5, 112 * 1024 * 1024))
        except Exception:
            pass
        _VMEM_LIMIT_CACHE = limit
    return _VMEM_LIMIT_CACHE


def _compiler_params(dims):
    return pltpu.CompilerParams(dimension_semantics=dims,
                                vmem_limit_bytes=_vmem_limit_bytes())


_DEFAULT_TM_CACHE = None


def _default_tile_m():
    global _DEFAULT_TM_CACHE
    if _DEFAULT_TM_CACHE is None:
        tm = 256
        try:
            kind = jax.devices()[0].device_kind.lower()
            if "v5 lite" in kind or "v5lite" in kind or "v5e" in kind:
                tm = 128                               # v5e MXU is 4x128x128
        except Exception:
            pass
        _DEFAULT_TM_CACHE = tm
    return _DEFAULT_TM_CACHE


_BUFFERED1_CACHE = None


def _buffered1_supported():
    """One-time probe: can constant operands be single-buffered with pl.Buffered(1)?"""
    global _BUFFERED1_CACHE
    if _BUFFERED1_CACHE is None:
        ok = False
        if hasattr(pl, "Buffered"):
            try:
                def _probe(c_ref, x_ref, o_ref):
                    o_ref[...] = x_ref[...] + c_ref[...]

                f = pl.pallas_call(
                    _probe,
                    out_shape=jax.ShapeDtypeStruct((16, 128), jnp.float32),
                    grid_spec=pltpu.PrefetchScalarGridSpec(
                        num_scalar_prefetch=0,
                        grid=(2,),
                        in_specs=[
                            pl.BlockSpec((8, 128), lambda i: (0, 0),
                                         pipeline_mode=pl.Buffered(1)),
                            pl.BlockSpec((8, 128), lambda i: (i, 0)),
                        ],
                        out_specs=pl.BlockSpec((8, 128), lambda i: (i, 0))),
                    compiler_params=_compiler_params(("arbitrary",)),
                )
                jax.block_until_ready(
                    f(jnp.ones((8, 128), jnp.float32), jnp.ones((16, 128), jnp.float32)))
                ok = True
            except Exception:
                ok = False
        _BUFFERED1_CACHE = ok
    return _BUFFERED1_CACHE


def _const_spec(shape, index_map):
    """BlockSpec for never-refetched operands: single-buffered when supported."""
    if _buffered1_supported():
        return pl.BlockSpec(shape, index_map, pipeline_mode=pl.Buffered(1))
    return pl.BlockSpec(shape, index_map)


_ROLL_CACHE = None


def _sublane_roll_supported():
    """One-time probe: does pltpu.roll along the sublane axis lower cleanly?"""
    global _ROLL_CACHE
    if _ROLL_CACHE is None:
        ok = False
        try:
            def _probe(x_ref, o_ref):
                o_ref[...] = pltpu.roll(x_ref[...], shift=1, axis=0)

            f = pl.pallas_call(_probe,
                               out_shape=jax.ShapeDtypeStruct((16, 128), jnp.float32))
            jax.block_until_ready(f(jnp.ones((16, 128), jnp.float32)))
            ok = True
        except Exception:
            ok = False
        _ROLL_CACHE = ok
    return _ROLL_CACHE


# ----------------------------------------------------------------------------- kernel 1: LN1 + in_proj (u / z split)
def _ln_in_proj_kernel(eps, x_ref, g_ref, b_ref, wu_ref, wz_ref, u_ref, z_ref):
    x = x_ref[...].astype(jnp.float32)
    mu = jnp.mean(x, axis=-1, keepdims=True)
    xc = x - mu
    var = jnp.mean(xc * xc, axis=-1, keepdims=True)
    xn = xc * lax.rsqrt(var + eps) * g_ref[...].astype(jnp.float32) \
         + b_ref[...].astype(jnp.float32)
    xn = xn.astype(wu_ref.dtype)
    u_ref[...] = jnp.dot(xn, wu_ref[...],
                         preferred_element_type=jnp.float32).astype(u_ref.dtype)
    z_ref[...] = jnp.dot(xn, wz_ref[...],
                         preferred_element_type=jnp.float32).astype(z_ref.dtype)


def ln_in_proj(x2d, gamma, beta, w_u, w_z, *, eps=1e-6, tile_m=None):
    M, D = x2d.shape
    dI = w_u.shape[1]
    tm = min(tile_m or _default_tile_m(), _round_up(M, 8))
    Mp = _round_up(M, tm)
    if Mp != M:
        x2d = jnp.pad(x2d, ((0, Mp - M), (0, 0)))
    u, z = pl.pallas_call(
        partial(_ln_in_proj_kernel, eps),
        out_shape=(jax.ShapeDtypeStruct((Mp, dI), x2d.dtype),
                   jax.ShapeDtypeStruct((Mp, dI), x2d.dtype)),
        grid_spec=pltpu.PrefetchScalarGridSpec(
            num_scalar_prefetch=0,
            grid=(Mp // tm,),
            in_specs=[
                pl.BlockSpec((tm, D), lambda i: (i, 0)),
                _const_spec((1, D), lambda i: (0, 0)),
                _const_spec((1, D), lambda i: (0, 0)),
                _const_spec((D, dI), lambda i: (0, 0)),
                _const_spec((D, dI), lambda i: (0, 0)),
            ],
            out_specs=[pl.BlockSpec((tm, dI), lambda i: (i, 0)),
                       pl.BlockSpec((tm, dI), lambda i: (i, 0))],
        ),
        compiler_params=_compiler_params(("parallel",)),
    )(x2d, gamma.reshape(1, D), beta.reshape(1, D), w_u, w_z)
    return u[:M], z[:M]


# ----------------------------------------------------------------------------- kernel 2: conv + SiLU + fused x_proj/dt_proj
def _conv_xproj_kernel(use_roll, x_ref, wc_ref, bcv_ref, wdt_ref, wbc_ref,
                       u_ref, dt_ref, bc_ref):
    """Depthwise causal conv1d + SiLU, then (u @ W_dt_fused) and (u @ W_bc) while u
    is still resident in VMEM.  The causal left pad is done in-kernel."""
    K = wc_ref.shape[0]
    L = x_ref.shape[1]
    x = x_ref[0].astype(jnp.float32)                    # (L, dI)
    wc = wc_ref[...].astype(jnp.float32)                # (K, dI)

    acc = x * wc[K - 1]                                 # tap aligned with current row
    rows = lax.broadcasted_iota(jnp.int32, (L, 1), 0)
    for k in range(K - 1):                              # static, tiny (K=4)
        s = K - 1 - k                                   # causal shift of this tap
        if use_roll:
            shifted = pltpu.roll(x, shift=s, axis=0)    # XLU sublane roll
            shifted = jnp.where(rows >= s, shifted, 0.0)
        else:
            shifted = jnp.concatenate(
                [jnp.zeros((s, x.shape[1]), jnp.float32), x[:L - s, :]], axis=0)
        acc = acc + shifted * wc[k]

    u = _silu_k(acc + bcv_ref[...].astype(jnp.float32))  # (L, dI)
    u_ref[0] = u.astype(u_ref.dtype)

    u_mm = u.astype(wdt_ref.dtype)
    dt_ref[0] = jnp.dot(u_mm, wdt_ref[...],
                        preferred_element_type=jnp.float32).astype(dt_ref.dtype)
    bc_ref[0] = jnp.dot(u_mm, wbc_ref[...],
                        preferred_element_type=jnp.float32).astype(bc_ref.dtype)


def conv_silu_xproj(x_pre, w_conv, b_conv, w_dt_fused, w_bc):
    # TODO(synk): for very long sequences this per-batch full-L block should be
    # L-tiled with a (K-1)-row halo; left whole here for simplicity.
    B, L, dI = x_pre.shape
    K = w_conv.shape[0]
    BCW = w_bc.shape[1]
    return pl.pallas_call(
        partial(_conv_xproj_kernel, _sublane_roll_supported()),
        out_shape=(jax.ShapeDtypeStruct((B, L, dI), x_pre.dtype),
                   jax.ShapeDtypeStruct((B, L, dI), x_pre.dtype),
                   jax.ShapeDtypeStruct((B, L, BCW), x_pre.dtype)),
        grid_spec=pltpu.PrefetchScalarGridSpec(
            num_scalar_prefetch=0,
            grid=(B,),
            in_specs=[
                pl.BlockSpec((1, L, dI), lambda b: (b, 0, 0)),
                _const_spec((K, dI), lambda b: (0, 0)),
                _const_spec((1, dI), lambda b: (0, 0)),
                _const_spec((dI, dI), lambda b: (0, 0)),
                _const_spec((dI, BCW), lambda b: (0, 0)),
            ],
            out_specs=[pl.BlockSpec((1, L, dI), lambda b: (b, 0, 0)),
                       pl.BlockSpec((1, L, dI), lambda b: (b, 0, 0)),
                       pl.BlockSpec((1, L, BCW), lambda b: (b, 0, 0))],
        ),
        compiler_params=_compiler_params(("parallel",)),
    )(x_pre, w_conv, b_conv.reshape(1, dI), w_dt_fused, w_bc)


# ----------------------------------------------------------------------------- kernel 3: selective scan (L-chunked, dI-tiled)
def _scan_kernel(n_state, group,
                 u_ref, dt_ref, z_ref, bc_ref, a_ref, d_ref, dtb_ref,
                 o_ref, h_ref, da_ref, hs_ref):
    """One (batch, d_inner-tile, L-chunk) step of the Mamba scan.
    State (N, tile_di) is carried in VMEM scratch across L-chunks."""
    c = pl.program_id(2)
    T = u_ref.shape[1]

    u = u_ref[0].astype(jnp.float32)                              # (T, dIt)
    z = z_ref[0].astype(jnp.float32)
    delta = _softplus(dt_ref[0].astype(jnp.float32)
                      + dtb_ref[...].astype(jnp.float32))         # (T, dIt)
    bc = bc_ref[0].astype(jnp.float32)                            # (T, BCW)
    bs = bc[:, :n_state]                                          # (T, N)
    cs = bc[:, n_state:2 * n_state]                               # (T, N)
    a = a_ref[...].astype(jnp.float32)                            # (N, dIt)

    da_ref[...] = jnp.exp(delta[:, None, :] * a[None, :, :])      # exp(delta*A)
    hs_ref[...] = (delta * u)[:, None, :] * bs[:, :, None]        # delta*u*B

    @pl.when(c == 0)
    def _():
        h_ref[...] = jnp.zeros_like(h_ref)

    def _group(g, h):
        base = pl.multiple_of(g * group, group)
        da_g = da_ref[pl.ds(base, group)]                         # (G, N, dIt)
        db_g = hs_ref[pl.ds(base, group)]
        for k in range(group):                                    # 8-way unrolled recurrence
            h = da_g[k] * h + db_g[k]
            hs_ref[base + k] = h                                  # full (N, dIt) slab store
        return h

    h = lax.fori_loop(0, T // group, _group, h_ref[...], unroll=False)
    h_ref[...] = h

    # C contraction for the whole chunk at once (VPU multiply + XLU sublane reduce)
    ys = jnp.sum(cs[:, :, None] * hs_ref[...], axis=1)            # (T, dIt)
    y = ys + d_ref[...].astype(jnp.float32) * u
    o_ref[0] = (y * _silu_k(z)).astype(o_ref.dtype)


def selective_scan(u, dt, z, bc, a_neg_t, d_param, dt_bias, *,
                   n_state, tile_l, tile_di=256, group=8):
    B, Lp, dI = u.shape
    BCW = bc.shape[-1]
    N = n_state
    tile_di = min(tile_di, dI)
    if dI % tile_di != 0 or (tile_di % 128 != 0 and tile_di != dI):
        tile_di = dI
    assert Lp % tile_l == 0 and tile_l % group == 0

    grid = (B, dI // tile_di, Lp // tile_l)
    return pl.pallas_call(
        partial(_scan_kernel, N, group),
        out_shape=jax.ShapeDtypeStruct((B, Lp, dI), u.dtype),
        grid_spec=pltpu.PrefetchScalarGridSpec(
            num_scalar_prefetch=0,
            grid=grid,
            in_specs=[
                pl.BlockSpec((1, tile_l, tile_di), lambda b, d, c: (b, c, d)),  # u
                pl.BlockSpec((1, tile_l, tile_di), lambda b, d, c: (b, c, d)),  # dt
                pl.BlockSpec((1, tile_l, tile_di), lambda b, d, c: (b, c, d)),  # z (gate)
                pl.BlockSpec((1, tile_l, BCW), lambda b, d, c: (b, c, 0)),      # [B | C]
                pl.BlockSpec((N, tile_di), lambda b, d, c: (0, d)),             # -exp(A_log).T
                pl.BlockSpec((1, tile_di), lambda b, d, c: (0, d)),             # D
                pl.BlockSpec((1, tile_di), lambda b, d, c: (0, d)),             # dt bias
            ],
            out_specs=pl.BlockSpec((1, tile_l, tile_di), lambda b, d, c: (b, c, d)),
            scratch_shapes=[
                pltpu.VMEM((N, tile_di), jnp.float32),            # carried SSM state
                pltpu.VMEM((tile_l, N, tile_di), jnp.float32),    # exp(delta*A) chunk
                pltpu.VMEM((tile_l, N, tile_di), jnp.float32),    # delta*u*B -> h_t chunk
            ],
        ),
        compiler_params=_compiler_params(("parallel", "parallel", "arbitrary")),
    )(u, dt, z, bc, a_neg_t, d_param.reshape(1, dI), dt_bias.reshape(1, dI))


# ----------------------------------------------------------------------------- kernel 4: plain matmul (+ residual)
def _matmul_kernel(x_ref, w_ref, o_ref):
    o_ref[...] = jnp.dot(x_ref[...].astype(w_ref.dtype), w_ref[...],
                         preferred_element_type=jnp.float32).astype(o_ref.dtype)


def _matmul_res_kernel(x_ref, w_ref, r_ref, o_ref):
    o_ref[...] = (jnp.dot(x_ref[...].astype(w_ref.dtype), w_ref[...],
                          preferred_element_type=jnp.float32)
                  + r_ref[...].astype(jnp.float32)).astype(o_ref.dtype)


def linear(x2d, w, residual=None, *, tile_m=None):
    """y = x @ w (+ residual).  Resident (single-buffered) weight, M tiled."""
    M, Kd = x2d.shape
    Nd = w.shape[1]
    tm = min(tile_m or _default_tile_m(), _round_up(M, 8))
    Mp = _round_up(M, tm)
    if Mp != M:
        x2d = jnp.pad(x2d, ((0, Mp - M), (0, 0)))
        if residual is not None:
            residual = jnp.pad(residual, ((0, Mp - M), (0, 0)))
    x_spec = pl.BlockSpec((tm, Kd), lambda i: (i, 0))
    w_spec = _const_spec((Kd, Nd), lambda i: (0, 0))
    o_spec = pl.BlockSpec((tm, Nd), lambda i: (i, 0))
    cp = _compiler_params(("parallel",))
    if residual is None:
        out = pl.pallas_call(
            _matmul_kernel,
            out_shape=jax.ShapeDtypeStruct((Mp, Nd), x2d.dtype),
            grid_spec=pltpu.PrefetchScalarGridSpec(
                num_scalar_prefetch=0, grid=(Mp // tm,),
                in_specs=[x_spec, w_spec], out_specs=o_spec),
            compiler_params=cp,
        )(x2d, w)
    else:
        r_spec = pl.BlockSpec((tm, Nd), lambda i: (i, 0))
        out = pl.pallas_call(
            _matmul_res_kernel,
            out_shape=jax.ShapeDtypeStruct((Mp, Nd), x2d.dtype),
            grid_spec=pltpu.PrefetchScalarGridSpec(
                num_scalar_prefetch=0, grid=(Mp // tm,),
                in_specs=[x_spec, w_spec, r_spec], out_specs=o_spec),
            compiler_params=cp,
        )(x2d, w, residual)
    return out[:M]


# ----------------------------------------------------------------------------- kernel 5: LN2 + MLP + residual
def _mlp_block_kernel(eps, h_ref, g_ref, be_ref, w1_ref, b1_ref, w2_ref, b2_ref,
                      o_ref, xn_ref, acc_ref):
    """out = h + fc2(relu(fc1(LayerNorm(h)))), hidden dim K-tiled on grid axis 1."""
    k = pl.program_id(1)

    @pl.when(k == 0)
    def _init():
        x = h_ref[...].astype(jnp.float32)
        mu = jnp.mean(x, axis=-1, keepdims=True)
        xc = x - mu
        var = jnp.mean(xc * xc, axis=-1, keepdims=True)
        xn = xc * lax.rsqrt(var + eps) * g_ref[...].astype(jnp.float32) \
             + be_ref[...].astype(jnp.float32)
        xn_ref[...] = xn.astype(xn_ref.dtype)                 # cached LN (matmul dtype)
        acc_ref[...] = x + b2_ref[...].astype(jnp.float32)    # residual + fc2 bias

    h1 = jnp.dot(xn_ref[...], w1_ref[...], preferred_element_type=jnp.float32) \
         + b1_ref[...].astype(jnp.float32)
    a = jnp.maximum(h1, 0.0).astype(w2_ref.dtype)             # ReLU (act_layer=nn.ReLU)
    acc_ref[...] += jnp.dot(a, w2_ref[...], preferred_element_type=jnp.float32)

    @pl.when(k == pl.num_programs(1) - 1)
    def _fin():
        o_ref[...] = acc_ref[...].astype(o_ref.dtype)


def mlp_block(h2d, gamma, beta, w1, b1, w2, b2, *, eps=1e-6, tile_m=None, tile_k=None):
    M, D = h2d.shape
    Dh = w1.shape[1]
    assert w2.shape[1] == D, "residual requires out_features == in_features"

    # lane-dense hidden dim: padding is exact only because ReLU(0)=0 and padded
    # b1/W2 entries are zero.
    Dhp = _round_up(Dh, 128)
    if Dhp != Dh:
        w1 = jnp.pad(w1, ((0, 0), (0, Dhp - Dh)))
        b1 = jnp.pad(b1, (0, Dhp - Dh))
        w2 = jnp.pad(w2, ((0, Dhp - Dh), (0, 0)))

    tm = min(tile_m or _default_tile_m(), _round_up(M, 8))
    Mp = _round_up(M, tm)
    if Mp != M:
        h2d = jnp.pad(h2d, ((0, Mp - M), (0, 0)))

    if tile_k is None:
        # keep W1/W2 fully resident (single K step) whenever they fit the VMEM budget
        itemsize = jnp.dtype(w1.dtype).itemsize
        resident = 2 * D * Dhp * itemsize + tm * Dhp * 4 + 3 * tm * D * 4
        if resident <= _vmem_limit_bytes() // 2:
            tile_k = Dhp
        else:
            tile_k = 512 if Dhp % 512 == 0 else (256 if Dhp % 256 == 0 else 128)
    tile_k = min(tile_k, Dhp)
    assert Dhp % tile_k == 0

    gamma = gamma.reshape(1, D)
    beta = beta.reshape(1, D)
    b1 = b1.reshape(1, Dhp)
    b2 = b2.reshape(1, D)
    k_steps = Dhp // tile_k
    # K-varying weight blocks must stay double-buffered; fully-resident ones can be
    # single-buffered.
    wspec = _const_spec if k_steps == 1 else pl.BlockSpec

    out = pl.pallas_call(
        partial(_mlp_block_kernel, eps),
        out_shape=jax.ShapeDtypeStruct((Mp, D), h2d.dtype),
        grid_spec=pltpu.PrefetchScalarGridSpec(
            num_scalar_prefetch=0,
            grid=(Mp // tm, k_steps),
            in_specs=[
                pl.BlockSpec((tm, D), lambda i, k: (i, 0)),       # h (residual / LN input)
                _const_spec((1, D), lambda i, k: (0, 0)),         # gamma
                _const_spec((1, D), lambda i, k: (0, 0)),         # beta
                wspec((D, tile_k), lambda i, k: (0, k)),          # W1 block
                wspec((1, tile_k), lambda i, k: (0, k)),          # b1 block
                wspec((tile_k, D), lambda i, k: (k, 0)),          # W2 block
                _const_spec((1, D), lambda i, k: (0, 0)),         # b2
            ],
            out_specs=pl.BlockSpec((tm, D), lambda i, k: (i, 0)),
            scratch_shapes=[
                pltpu.VMEM((tm, D), w1.dtype),      # cached LayerNorm(h)
                pltpu.VMEM((tm, D), jnp.float32),   # f32 accumulator
            ],
        ),
        compiler_params=_compiler_params(("parallel", "arbitrary")),
    )(h2d, gamma, beta, w1, b1, w2, b2)
    return out[:M]


# ----------------------------------------------------------------------------- CMBlock forward
def cm_block_forward(x, p, *, tile_m=None, scan_tile_l=128, scan_tile_di=256,
                     mlp_tile_k=None, matmul_dtype=None):
    """x: (B, L, D) -> (B, L, D).  Matches CMBlock._forward (dropout/drop_path = identity).
    matmul_dtype=jnp.bfloat16 runs MXU operands in bf16 (f32 accumulation kept)."""
    B, L, D = x.shape
    d_inner = p["conv_w"].shape[1]
    N = p["A_log"].shape[1]
    R = p["W_dt"].shape[0]

    def mcast(w):
        return w.astype(matmul_dtype) if matmul_dtype is not None else w

    # pad the sequence length once so the scan works on whole L-chunks
    tile_l = _round_up(min(scan_tile_l, _round_up(L, 8)), 8)
    Lp = _round_up(L, tile_l)
    if Lp != L:
        x = jnp.pad(x, ((0, 0), (0, Lp - L), (0, 0)))
    M = B * Lp
    x2d = x.reshape(M, D)

    # --- norm1 + in_proj, u and z emitted as separate lane-dense outputs
    w_in = mcast(p["W_in"])
    x_pre, z = ln_in_proj(x2d, p["ln1_g"], p["ln1_b"],
                          w_in[:, :d_inner], w_in[:, d_inner:], tile_m=tile_m)
    x_pre = x_pre.reshape(B, Lp, d_inner)
    z = z.reshape(B, Lp, d_inner)

    # --- fold dt_proj into x_proj:  dt = u @ (W_x[:, :R] @ W_dt)
    w_x32 = p["W_x"].astype(jnp.float32)
    w_dt_fused = mcast((w_x32[:, :R] @ p["W_dt"].astype(jnp.float32)).astype(p["W_x"].dtype))
    BCW = _round_up(max(2 * N, 128), 128)                      # lane-dense [B | C] output
    w_bc = mcast(jnp.pad(p["W_x"][:, R:], ((0, 0), (0, BCW - 2 * N))))

    # --- causal depthwise conv + SiLU fused with x_proj/dt_proj (u stays in VMEM)
    u, dt, bcmat = conv_silu_xproj(x_pre, p["conv_w"], p["conv_b"], w_dt_fused, w_bc)

    # --- selective scan (L chunked, d_inner tiled, state carried in VMEM scratch)
    a_neg_t = (-jnp.exp(p["A_log"].astype(jnp.float32))).T     # (N, d_inner)
    y = selective_scan(u, dt, z, bcmat, a_neg_t, p["D"], p["dt_bias"],
                       n_state=N, tile_l=tile_l, tile_di=scan_tile_di)

    # --- out_proj + residual:  h = x + Mamba(norm1(x))
    h = linear(y.reshape(M, d_inner), mcast(p["W_out"]), residual=x2d, tile_m=tile_m)

    # --- MLP branch fused:  out = h + mlp(norm2(h))
    # TODO(synk): CMBlock references self.drop_path which is undefined in the given
    # module; treated as identity (consistent with drop=0.0).
    out = mlp_block(h, p["ln2_g"], p["ln2_b"], mcast(p["W1"]), p["b1"],
                    mcast(p["W2"]), p["b2"], tile_m=tile_m, tile_k=mlp_tile_k)
    return out.reshape(B, Lp, D)[:, :L]


# ----------------------------------------------------------------------------- params & reference
def init_cmblock_params(key, hidden_dim, *, d_state=16, d_conv=4, expand=2,
                        mlp_ratio=2, dtype=jnp.float32):
    D = hidden_dim
    dI = int(expand * D)
    R = max(1, math.ceil(D / 16))
    Dh = int(D * mlp_ratio)
    ks = jax.random.split(key, 12)
    uni = lambda k, shape, b: jax.random.uniform(k, shape, dtype, -b, b)
    p = {}
    p["ln1_g"] = 1.0 + 0.1 * jax.random.normal(ks[0], (D,), dtype)
    p["ln1_b"] = 0.1 * jax.random.normal(ks[1], (D,), dtype)
    p["W_in"] = uni(ks[2], (D, 2 * dI), 1.0 / math.sqrt(D))
    p["conv_w"] = uni(ks[3], (d_conv, dI), 1.0 / math.sqrt(d_conv))
    p["conv_b"] = uni(ks[4], (dI,), 1.0 / math.sqrt(d_conv))
    p["W_x"] = uni(ks[5], (dI, R + 2 * d_state), 1.0 / math.sqrt(dI))
    p["W_dt"] = uni(ks[6], (R, dI), R ** -0.5)
    dt = jnp.exp(jax.random.uniform(ks[7], (dI,), jnp.float32)
                 * (math.log(0.1) - math.log(0.001)) + math.log(0.001))
    dt = jnp.clip(dt, 1e-4, None)
    p["dt_bias"] = (dt + jnp.log(-jnp.expm1(-dt))).astype(dtype)
    p["A_log"] = jnp.log(jnp.broadcast_to(
        jnp.arange(1, d_state + 1, dtype=jnp.float32), (dI, d_state))).astype(dtype)
    p["D"] = jnp.ones((dI,), dtype)
    p["W_out"] = uni(ks[8], (dI, D), 1.0 / math.sqrt(dI))
    p["ln2_g"] = 1.0 + 0.1 * jax.random.normal(ks[9], (D,), dtype)
    p["ln2_b"] = 0.1 * jax.random.normal(ks[10], (D,), dtype)
    k1, k2, k3, k4 = jax.random.split(ks[11], 4)
    p["W1"] = uni(k1, (D, Dh), 1.0 / math.sqrt(D))
    p["b1"] = uni(k2, (Dh,), 1.0 / math.sqrt(D))
    p["W2"] = uni(k3, (Dh, D), 1.0 / math.sqrt(Dh))
    p["b2"] = uni(k4, (D,), 1.0 / math.sqrt(Dh))
    return p


def _layernorm_ref(x, g, b, eps=1e-6):
    mu = x.mean(-1, keepdims=True)
    var = ((x - mu) ** 2).mean(-1, keepdims=True)
    return (x - mu) * lax.rsqrt(var + eps) * g + b


def cm_block_reference(x, p):
    """Pure-JAX reference of the same CMBlock forward semantics."""
    B, L, D = x.shape
    dI = p["conv_w"].shape[1]
    N = p["A_log"].shape[1]
    R = p["W_dt"].shape[0]
    K = p["conv_w"].shape[0]

    xn = _layernorm_ref(x, p["ln1_g"], p["ln1_b"])
    xz = xn @ p["W_in"]
    u, z = xz[..., :dI], xz[..., dI:]

    up = jnp.pad(u, ((0, 0), (K - 1, 0), (0, 0)))
    uc = sum(up[:, k:k + L, :] * p["conv_w"][k] for k in range(K)) + p["conv_b"]
    uc = _silu_ref(uc)

    x_dbl = uc @ p["W_x"]
    dt = x_dbl[..., :R] @ p["W_dt"]
    Bs = x_dbl[..., R:R + N]
    Cs = x_dbl[..., R + N:]

    A = -jnp.exp(p["A_log"].astype(jnp.float32))                 # (dI, N)
    delta = _softplus(dt + p["dt_bias"])                         # (B, L, dI)
    dA = jnp.exp(delta[..., None] * A[None, None])               # (B, L, dI, N)
    dBu = delta[..., None] * Bs[:, :, None, :] * uc[..., None]

    def step(h, inp):
        dA_t, dBu_t, C_t = inp
        h = dA_t * h + dBu_t
        return h, jnp.einsum("bdn,bn->bd", h, C_t)

    h0 = jnp.zeros((B, dI, N), jnp.float32)
    _, ys = lax.scan(step, h0, (dA.transpose(1, 0, 2, 3),
                                dBu.transpose(1, 0, 2, 3),
                                Cs.transpose(1, 0, 2)))
    ys = ys.transpose(1, 0, 2)
    y = (ys + p["D"] * uc) * _silu_ref(z)

    h = x + y @ p["W_out"]
    hn = _layernorm_ref(h, p["ln2_g"], p["ln2_b"])
    mlp = jnp.maximum(hn @ p["W1"] + p["b1"], 0.0) @ p["W2"] + p["b2"]
    return h + mlp


# ----------------------------------------------------------------------------- demo
if __name__ == "__main__":
    batch, seqlen, hidden_dim = 2, 16, 128    # small, lane-dense demo shapes
    key = jax.random.PRNGKey(0)
    kx, kp = jax.random.split(key)
    x = jax.random.normal(kx, (batch, seqlen, hidden_dim), jnp.float32)
    params = init_cmblock_params(kp, hidden_dim)

    ref = cm_block_reference(x, params)

    # default config (single scan chunk, resident MLP weights)
    out = jax.block_until_ready(cm_block_forward(x, params))
    assert out.shape == x.shape
    assert jnp.allclose(out, ref, atol=2e-2, rtol=2e-2)

    # exercise multi-chunk scan (VMEM state carry), d_inner tiling, multi-M tiles,
    # and the K-tiled MLP accumulator path
    out2 = jax.block_until_ready(
        cm_block_forward(x, params, tile_m=16, scan_tile_l=8, scan_tile_di=128,
                         mlp_tile_k=128))
    assert jnp.allclose(out2, ref, atol=2e-2, rtol=2e-2)

    # bf16 MXU-operand path (recommended on v6e/v7x); f32 accumulation retained
    out_bf16 = jax.block_until_ready(
        cm_block_forward(x, params, matmul_dtype=jnp.bfloat16))
    assert out_bf16.shape == x.shape
    assert bool(jnp.all(jnp.isfinite(out_bf16)))

    print("KERNEL_OK")
</pallas_src>

<mosaic_0001>
module attributes {stable_mosaic.version = 11 : i64} {
  func.func @_probe(%arg0: i32, %arg1: memref<8x128xf32, #tpu.memory_space<vmem>>, %arg2: memref<8x128xf32, #tpu.memory_space<vmem>>, %arg3: memref<8x128xf32, #tpu.memory_space<vmem>>) attributes {dimension_semantics = [#tpu.dimension_semantics<arbitrary>], iteration_bounds = array<i64: 2>, scalar_prefetch = 0 : i64, scratch_operands = 0 : i64, tpu.core_type = #tpu.core_type<tc>, window_params = [{pipeline_mode = #tpu.pipeline_mode<synchronous>, transform_indices = @transform_0, window_bounds = array<i64: 8, 128>}, {transform_indices = @transform_1, window_bounds = array<i64: 8, 128>}, {transform_indices = @transform_2, window_bounds = array<i64: 8, 128>}]} {
    %c0 = arith.constant 0 : index
    %c0_0 = arith.constant 0 : index
    %0 = vector.load %arg2[%c0, %c0_0] : memref<8x128xf32, #tpu.memory_space<vmem>>, vector<8x128xf32>
    %c0_1 = arith.constant 0 : index
    %c0_2 = arith.constant 0 : index
    %1 = vector.load %arg1[%c0_1, %c0_2] : memref<8x128xf32, #tpu.memory_space<vmem>>, vector<8x128xf32>
    %2 = arith.addf %0, %1 : vector<8x128xf32>
    %c0_3 = arith.constant 0 : index
    %c0_4 = arith.constant 0 : index
    %3 = vector.load %arg3[%c0_3, %c0_4] : memref<8x128xf32, #tpu.memory_space<vmem>>, vector<8x128xf32>
    tpu.vector_store %arg3[%c0_3, %c0_4], %2 {strides = array<i32>} : memref<8x128xf32, #tpu.memory_space<vmem>>, vector<8x128xf32>,
    return
  }
  func.func @transform_0(%arg0: i32) -> (i32, i32) {
    %c0_i32 = arith.constant 0 : i32
    %c0_i32_0 = arith.constant 0 : i32
    %c0_i32_1 = arith.constant 0 : i32
    return %c0_i32, %c0_i32_0 : i32, i32
  }
  func.func @transform_1(%arg0: i32) -> (i32, i32) {
    %c0_i32 = arith.constant 0 : i32
    %c0_i32_0 = arith.constant 0 : i32
    return %arg0, %c0_i32 : i32, i32
  }
  func.func @transform_2(%arg0: i32) -> (i32, i32) {
    %c0_i32 = arith.constant 0 : i32
    %c0_i32_0 = arith.constant 0 : i32
    return %arg0, %c0_i32 : i32, i32
  }
}

module attributes {stable_mosaic.version = 11 : i64} {
  func.func @_ln_in_proj_kernel(%arg0: i32, %arg1: memref<32x128xf32, #tpu.memory_space<vmem>>, %arg2: memref<1x128xf32, #tpu.memory_space<vmem>>, %arg3: memref<1x128xf32, #tpu.memory_space<vmem>>, %arg4: memref<128x256xf32, #tpu.memory_space<vmem>>, %arg5: memref<128x256xf32, #tpu.memory_space<vmem>>, %arg6: memref<32x256xf32, #tpu.memory_space<vmem>>, %arg7: memref<32x256xf32, #tpu.memory_space<vmem>>) attributes {dimension_semantics = [#tpu.dimension_semantics<parallel>], iteration_bounds = array<i64: 1>, scalar_prefetch = 0 : i64, scratch_operands = 0 : i64, tpu.core_type = #tpu.core_type<tc>, window_params = [{transform_indices = @transform_0, window_bounds = array<i64: 32, 128>}, {pipeline_mode = #tpu.pipeline_mode<synchronous>, transform_indices = @transform_1, window_bounds = array<i64: 1, 128>}, {pipeline_mode = #tpu.pipeline_mode<synchronous>, transform_indices = @transform_2, window_bounds = array<i64: 1, 128>}, {pipeline_mode = #tpu.pipeline_mode<synchronous>, transform_indices = @transform_3, window_bounds = array<i64: 128, 256>}, {pipeline_mode = #tpu.pipeline_mode<synchronous>, transform_indices = @transform_4, window_bounds = array<i64: 128, 256>}, {transform_indices = @transform_5, window_bounds = array<i64: 32, 256>}, {transform_indices = @transform_6, window_bounds = array<i64: 32, 256>}]} {
    %c0 = arith.constant 0 : index
    %c0_0 = arith.constant 0 : index
    %0 = vector.load %arg1[%c0, %c0_0] : memref<32x128xf32, #tpu.memory_space<vmem>>, vector<32x128xf32>
    %cst = arith.constant dense<0.000000e+00> : vector<32xf32>
    %1 = vector.multi_reduction <add>, %0, %cst [1] : vector<32x128xf32> to vector<32xf32>
    %2 = vector.shape_cast %1 : vector<32xf32> to vector<32x1xf32>
    %cst_1 = arith.constant 1.280000e+02 : f32
    %3 = vector.broadcast %cst_1 : f32 to vector<32x1xf32>
    %4 = arith.divf %2, %3 : vector<32x1xf32>
    %5 = vector.broadcast %4 : vector<32x1xf32> to vector<32x128xf32>
    %6 = arith.subf %0, %5 : vector<32x128xf32>
    %7 = arith.mulf %6, %6 : vector<32x128xf32>
    %cst_2 = arith.constant dense<0.000000e+00> : vector<32xf32>
    %8 = vector.multi_reduction <add>, %7, %cst_2 [1] : vector<32x128xf32> to vector<32xf32>
    %9 = vector.shape_cast %8 : vector<32xf32> to vector<32x1xf32>
    %cst_3 = arith.constant 1.280000e+02 : f32
    %10 = vector.broadcast %cst_3 : f32 to vector<32x1xf32>
    %11 = arith.divf %9, %10 : vector<32x1xf32>
    %cst_4 = arith.constant 9.99999997E-7 : f32
    %12 = vector.broadcast %cst_4 : f32 to vector<32x1xf32>
    %13 = arith.addf %11, %12 : vector<32x1xf32>
    %14 = math.rsqrt %13 : vector<32x1xf32>
    %15 = vector.broadcast %14 : vector<32x1xf32> to vector<32x128xf32>
    %16 = arith.mulf %6, %15 : vector<32x128xf32>
    %c0_5 = arith.constant 0 : index
    %c0_6 = arith.constant 0 : index
    %17 = vector.load %arg2[%c0_5, %c0_6] : memref<1x128xf32, #tpu.memory_space<vmem>>, vector<1x128xf32>
    %18 = vector.broadcast %17 : vector<1x128xf32> to vector<32x128xf32>
    %19 = arith.mulf %16, %18 : vector<32x128xf32>
    %c0_7 = arith.constant 0 : index
    %c0_8 = arith.constant 0 : index
    %20 = vector.load %arg3[%c0_7, %c0_8] : memref<1x128xf32, #tpu.memory_space<vmem>>, vector<1x128xf32>
    %21 = vector.broadcast %20 : vector<1x128xf32> to vector<32x128xf32>
    %22 = arith.addf %19, %21 : vector<32x128xf32>
    %c0_9 = arith.constant 0 : index
    %c0_10 = arith.constant 0 : index
    %23 = vector.load %arg4[%c0_9, %c0_10] : memref<128x256xf32, #tpu.memory_space<vmem>>, vector<128x256xf32>
    %cst_11 = arith.constant dense<0.000000e+00> : vector<32x256xf32>
    %24 = tpu.matmul %22, %23, %cst_11 {dimension_numbers = #tpu.dot_dimension_numbers<[1], [0], [0], [1], [0, 0, 1, 1], [], []>} : vector<32x128xf32>, vector<128x256xf32>, vector<32x256xf32> -> vector<32x256xf32>
    %c0_12 = arith.constant 0 : index
    %c0_13 = arith.constant 0 : index
    %25 = vector.load %arg6[%c0_12, %c0_13] : memref<32x256xf32, #tpu.memory_space<vmem>>, vector<32x256xf32>
    tpu.vector_store %arg6[%c0_12, %c0_13], %24 {strides = array<i32>} : memref<32x256xf32, #tpu.memory_space<vmem>>, vector<32x256xf32>,
    %c0_14 = arith.constant 0 : index
    %c0_15 = arith.constant 0 : index
    %26 = vector.load %arg5[%c0_14, %c0_15] : memref<128x256xf32, #tpu.memory_space<vmem>>, vector<128x256xf32>
    %cst_16 = arith.constant dense<0.000000e+00> : vector<32x256xf32>
    %27 = tpu.matmul %22, %26, %cst_16 {dimension_numbers = #tpu.dot_dimension_numbers<[1], [0], [0], [1], [0, 0, 1, 1], [], []>} : vector<32x128xf32>, vector<128x256xf32>, vector<32x256xf32> -> vector<32x256xf32>
    %c0_17 = arith.constant 0 : index
    %c0_18 = arith.constant 0 : index
    %28 = vector.load %arg7[%c0_17, %c0_18] : memref<32x256xf32, #tpu.memory_space<vmem>>, vector<32x256xf32>
    tpu.vector_store %arg7[%c0_17, %c0_18], %27 {strides = array<i32>} : memref<32x256xf32, #tpu.memory_space<vmem>>, vector<32x256xf32>,
    return
  }
  func.func @transform_0(%arg0: i32) -> (i32, i32) {
    %c0_i32 = arith.constant 0 : i32
    %c0_i32_0 = arith.constant 0 : i32
    return %arg0, %c0_i32 : i32, i32
  }
  func.func @transform_1(%arg0: i32) -> (i32, i32) {
    %c0_i32 = arith.constant 0 : i32
    %c0_i32_0 = arith.constant 0 : i32
    %c0_i32_1 = arith.constant 0 : i32
    return %c0_i32, %c0_i32_0 : i32, i32
  }
  func.func @transform_2(%arg0: i32) -> (i32, i32) {
    %c0_i32 = arith.constant 0 : i32
    %c0_i32_0 = arith.constant 0 : i32
    %c0_i32_1 = arith.constant 0 : i32
    return %c0_i32, %c0_i32_0 : i32, i32
  }
  func.func @transform_3(%arg0: i32) -> (i32, i32) {
    %c0_i32 = arith.constant 0 : i32
    %c0_i32_0 = arith.constant 0 : i32
    %c0_i32_1 = arith.constant 0 : i32
    return %c0_i32, %c0_i32_0 : i32, i32
  }
  func.func @transform_4(%arg0: i32) -> (i32, i32) {
    %c0_i32 = arith.constant 0 : i32
    %c0_i32_0 = arith.constant 0 : i32
    %c0_i32_1 = arith.constant 0 : i32
    return %c0_i32, %c0_i32_0 : i32, i32
  }
  func.func @transform_5(%arg0: i32) -> (i32, i32) {
    %c0_i32 = arith.constant 0 : i32
    %c0_i32_0 = arith.constant 0 : i32
    return %arg0, %c0_i32 : i32, i32
  }
  func.func @transform_6(%arg0: i32) -> (i32, i32) {
    %c0_i32 = arith.constant 0 : i32
    %c0_i32_0 = arith.constant 0 : i32
    return %arg0, %c0_i32 : i32, i32
  }
}

</mosaic_0001>

<llo_original>
// kernel: tpu_custom_call.1
$region0: #{tpu_custom_call.1}
  #allocation0 [shape = 'u32[]', space=smem, size = 0x4, offset = 0x4, fixed_abs, tag = 'smem constant byte address 0x4 - core index']
  #allocation1 [shape = 'u32[144,128]{1,0:T(1,128)}', space=vmem, size = 0x12000, scoped, tag = 'internal scratch']
  %s0 = inlined_call_operand.hbm [shape: f32[8,128], index: 0, kind: input, shape index: {}]
  %s1 = inlined_call_operand.hbm [shape: f32[16,128], index: 1, kind: input, shape index: {}]
  %s2 = inlined_call_operand.hbm [shape: f32[16,128], index: 2, kind: output, shape index: {}]
  %s3 = sld [smem:[#allocation0]]
  $region49: #{tpu_custom_call.1} parent=0
    _
  %s5 = ssub.s32 1, %s3
  %s6 = scalar_select 0, %s5, %s3
  $region1: #{tpu_custom_call.1} parent=0
    #allocation2 [shape = 'u8[4096]{0}', space=vmem, size = 0x1000, scoped, tag = 'input window, operand 0, single buffered']
    #allocation3 [shape = 's32[2]{0}', space=sflag, size = 0x8, scoped, tag = 'scoped memory for tpu_custom_call.1']
    #allocation4 [shape = 's32[2]{0}', space=sflag, size = 0x8, scoped, tag = 'scoped memory for tpu_custom_call.1']
    #allocation5 [shape = 'u8[8192]{0}', space=vmem, size = 0x2000, scoped, tag = 'input window, operand 1']
    #allocation6 [shape = 's32[2]{0}', space=sflag, size = 0x8, scoped, tag = 'scoped memory for tpu_custom_call.1']
    #allocation7 [shape = 'u8[8192]{0}', space=vmem, size = 0x2000, scoped, tag = 'output window, operand 0']
    %7 = vsyncpa [#allocation3], 0
    %8 = vsyncpa [#allocation6], 0
    %s9 = scalar_lea.sflag [#allocation6], 1
    %10 = vsyncpa %s9, 0
    %11 = vsyncpa [#allocation4], 0
    %s12 = scalar_lea.sflag [#allocation4], 1
    %13 = vsyncpa %s12, 0
    loop: start=0, step=1, limit=4
    $region2: #{tpu_custom_call.1} parent=1 // loop_pre_header
      _
    $region3: #{tpu_custom_call.1} parent=1 // loop_header
      %s15 = sphi 0, %s19
      %p16 = scmp.ge.s32.totalorder %s15, 4
      %s23 = sphi 0, %s23
      %s25 = sphi 0, %s23
      %s26 = sphi 0, %s25
      %s40 = sphi 0, %s26
      %s46 = sphi 0, %s48
      %s49 = sphi 0, %s46
      %s50 = sphi 0, %s49
      %s66 = sphi 0, %s50
      %s72 = sphi 0, %s74
      %s75 = sphi 0, %s72
      %s76 = sphi 0, %s75
      %s92 = sphi 0, %s76
    $region4: #{tpu_custom_call.1} parent=1 // loop_header_branch
      %18 = sbr.rel (%p16) target = $region8
    $region5: #{tpu_custom_call.1} parent=1 // loop_body
      %s20 = ssub.s32 %s15, 1
      %s21 = ssub.s32 %s15, 2
      %s22 = sadd.s32 %s15, 1
      %s24 = sadd.s32 %s23, 1
      %p27 = scmp.eq.s32.totalorder %s15, 1
      %p28 = scmp.ne.s32.totalorder %s23, %s25
      %p29 = scmp.eq.s32.totalorder %s15, 0
      %p30 = por %p28, %p29
      %p31 = scmp.ne.s32.totalorder %s23, %s25
      %p32 = scmp.eq.s32.totalorder %s20, 1
      %p33 = por %p31, %p32
      %p34 = scmp.ne.s32.totalorder %s25, %s26
      %p35 = scmp.eq.s32.totalorder %s20, 0
      %p36 = por %p34, %p35
      %p37 = scmp.ne.s32.totalorder %s25, %s26
      %p38 = scmp.eq.s32.totalorder %s21, 1
      %p39 = por %p37, %p38
      %p41 = scmp.ne.s32.totalorder %s26, %s40
      %p42 = scmp.eq.s32.totalorder %s21, 0
      %p43 = por %p41, %p42
      %s44 = ssub.s32 %s15, %s22
      %p45 = scmp.eq.s32.totalorder %s44, 0
      %s47 = sadd.s32 %s46, 1
      %s48 = scalar_select %p45, %s46, %s47
      %p51 = pneg %p45
      %p52 = scmp.eq.s32.totalorder %s15, 1
      %p53 = por %p51, %p52
      %p54 = scmp.ne.s32.totalorder %s46, %s49
      %p55 = scmp.eq.s32.totalorder %s15, 0
      %p56 = por %p54, %p55
      %p57 = scmp.ne.s32.totalorder %s46, %s49
      %p58 = scmp.eq.s32.totalorder %s20, 1
      %p59 = por %p57, %p58
      %p60 = scmp.ne.s32.totalorder %s49, %s50
      %p61 = scmp.eq.s32.totalorder %s20, 0
      %p62 = por %p60, %p61
      %p63 = scmp.ne.s32.totalorder %s49, %s50
      %p64 = scmp.eq.s32.totalorder %s21, 1
      %p65 = por %p63, %p64
      %p67 = scmp.ne.s32.totalorder %s50, %s66
      %p68 = scmp.eq.s32.totalorder %s21, 0
      %p69 = por %p67, %p68
      %s70 = ssub.s32 %s15, %s22
      %p71 = scmp.eq.s32.totalorder %s70, 0
      %s73 = sadd.s32 %s72, 1
      %s74 = scalar_select %p71, %s72, %s73
      %p77 = pneg %p71
      %p78 = scmp.eq.s32.totalorder %s15, 1
      %p79 = por %p77, %p78
      %p80 = scmp.ne.s32.totalorder %s72, %s75
      %p81 = scmp.eq.s32.totalorder %s15, 0
      %p82 = por %p80, %p81
      %p83 = scmp.ne.s32.totalorder %s72, %s75
      %p84 = scmp.eq.s32.totalorder %s20, 1
      %p85 = por %p83, %p84
      %p86 = scmp.ne.s32.totalorder %s75, %s76
      %p87 = scmp.eq.s32.totalorder %s20, 0
      %p88 = por %p86, %p87
      %p89 = scmp.ne.s32.totalorder %s75, %s76
      %p90 = scmp.eq.s32.totalorder %s21, 1
      %p91 = por %p89, %p90
      %p93 = scmp.ne.s32.totalorder %s76, %s92
      %p94 = scmp.eq.s32.totalorder %s21, 0
      %p95 = por %p93, %p94
      %p96 = scmp.le.s32.totalorder 1, %s15
      %p97 = scmp.lt.s32.totalorder %s15, 3
      %p98 = pnand %p96, %p97
      %p99 = pneg %p98
      // Predicated region
      $region9: #{tpu_custom_call.1} parent=5 // pred_check
        _
      $region10: #{tpu_custom_call.1} parent=5 // pred_check_branch
        %101 = sbr.rel (%p98) target = $region12
      $region11: #{tpu_custom_call.1} parent=5 // pred_region
        %s102 = ssub.s32 %s15, 1
        // Predicated region
        $region13: #{tpu_custom_call.1} parent=11 // pred_check
          %p103 = pneg %p36
        $region14: #{tpu_custom_call.1} parent=11 // pred_check_branch
          %105 = sbr.rel (%p103) target = $region16
        $region15: #{tpu_custom_call.1} parent=11 // pred_region
          %s107 = ssub.s32 128, 128
          %108 = vsyncadd [#allocation3], %s107
          %s110 = sshll.u32 [#allocation2], 4
          %s111 = int_to_ptr.vmem [resolvable:$true] %s110
          %113 = dma.hbm_to_vmem [thread:$0]  %s0, 128, %s111, [#allocation3]
        $region16: #{tpu_custom_call.1} parent=11 // pred_fallthru
          _
      $region12: #{tpu_custom_call.1} parent=5 // pred_fallthru
        _
      %p114 = scmp.lt.s32.totalorder %s15, 2
      // Predicated region
      $region17: #{tpu_custom_call.1} parent=5 // pred_check
        %p115 = pneg %p114
      $region18: #{tpu_custom_call.1} parent=5 // pred_check_branch
        %117 = sbr.rel (%p115) target = $region20
      $region19: #{tpu_custom_call.1} parent=5 // pred_region
        // Predicated region
        $region21: #{tpu_custom_call.1} parent=19 // pred_check
          %p118 = pneg %p56
        $region22: #{tpu_custom_call.1} parent=19 // pred_check_branch
          %120 = sbr.rel (%p118) target = $region24
        $region23: #{tpu_custom_call.1} parent=19 // pred_region
          %s121 = sand.u32 %s46, 1
          %s122 = scalar_lea.sflag [#allocation6], %s121
          %s123 = sand.u32 %s46, 1
          %s124 = smul.addr %s123, 8
          %s125 = scalar_lea.vmem [#allocation5], %s124
          %s127 = ssub.s32 128, 128
          %128 = vsyncadd %s122, %s127
          %s129 = smul.addr %s15, 128
          %s130 = scalar_lea.hbm %s1, %s129
          %s132 = sshll.u32 %s125, 4
          %s133 = int_to_ptr.vmem [resolvable:$true] %s132
          %135 = dma.hbm_to_vmem [thread:$0]  %s130, 128, %s133, %s122
        $region24: #{tpu_custom_call.1} parent=19 // pred_fallthru
          _
      $region20: #{tpu_custom_call.1} parent=5 // pred_fallthru
        _
      %p136 = scmp.le.s32.totalorder 1, %s15
      %p137 = scmp.lt.s32.totalorder %s15, 3
      %p138 = pnand %p136, %p137
      %p139 = pneg %p138
      // Predicated region
      $region25: #{tpu_custom_call.1} parent=5 // pred_check
        _
      $region26: #{tpu_custom_call.1} parent=5 // pred_check_branch
        %141 = sbr.rel (%p138) target = $region28
      $region27: #{tpu_custom_call.1} parent=5 // pred_region
        %s142 = ssub.s32 %s15, 1
        // Predicated region
        $region29: #{tpu_custom_call.1} parent=27 // pred_check
          %p143 = pneg %p36
        $region30: #{tpu_custom_call.1} parent=27 // pred_check_branch
          %145 = sbr.rel (%p143) target = $region32
        $region31: #{tpu_custom_call.1} parent=27 // pred_region
          %146 = dma.done [#allocation3], 128
        $region32: #{tpu_custom_call.1} parent=27 // pred_fallthru
          _
        %s147 = sand.u32 %s49, 1
        %s148 = scalar_lea.sflag [#allocation6], %s147
        %s149 = sand.u32 %s49, 1
        %s150 = smul.addr %s149, 8
        %s151 = scalar_lea.vmem [#allocation5], %s150
        // Predicated region
        $region33: #{tpu_custom_call.1} parent=27 // pred_check
          %p152 = pneg %p62
        $region34: #{tpu_custom_call.1} parent=27 // pred_check_branch
          %154 = sbr.rel (%p152) target = $region36
        $region35: #{tpu_custom_call.1} parent=27 // pred_region
          %155 = dma.done %s148, 128
        $region36: #{tpu_custom_call.1} parent=27 // pred_fallthru
          _
        %p156 = pneg %p36
        %p157 = pneg %p33
        %s158 = sand.u32 %s49, 1
        %s159 = scalar_lea.sflag [#allocation6], %s158
        %s160 = sand.u32 %s49, 1
        %s161 = smul.addr %s160, 8
        %s162 = scalar_lea.vmem [#allocation5], %s161
        %p163 = pneg %p62
        %p164 = pneg %p59
        %p165 = pneg %p88
        %p166 = pneg %p85
        %s167 = sand.u32 %s75, 1
        %s168 = scalar_lea.sflag [#allocation4], %s167
        %s169 = sand.u32 %s75, 1
        %s170 = smul.addr %s169, 8
        %s171 = scalar_lea.vmem [#allocation7], %s170
        %v172 = vld [vmem:[%s151] sm:$0xff]
        %v173 = vld [vmem:[#allocation2] sm:$0xff]
        %v174 = vadd.f32 %v172, %v173
        %175 = vst [vmem:[%s171] sm:$0xff] %v174
        %s176 = sand.u32 %s75, 1
        %s177 = scalar_lea.sflag [#allocation4], %s176
        %s178 = sand.u32 %s75, 1
        %s179 = smul.addr %s178, 8
        %s180 = scalar_lea.vmem [#allocation7], %s179
        // Predicated region
        $region37: #{tpu_custom_call.1} parent=27 // pred_check
          %p181 = pneg %p85
        $region38: #{tpu_custom_call.1} parent=27 // pred_check_branch
          %183 = sbr.rel (%p181) target = $region40
        $region39: #{tpu_custom_call.1} parent=27 // pred_region
          %s185 = ssub.s32 128, 128
          %186 = vsyncadd %s177, %s185
          %s187 = smul.addr %s20, 128
          %s188 = scalar_lea.hbm %s2, %s187
          %s190 = sshll.u32 %s180, 4
          %s191 = int_to_ptr.vmem [resolvable:$true] %s190
          %193 = dma.vmem_to_hbm [thread:$0]  %s191, 128, %s188, %s177
        $region40: #{tpu_custom_call.1} parent=27 // pred_fallthru
          _
      $region28: #{tpu_custom_call.1} parent=5 // pred_fallthru
        _
      %p194 = scmp.le.s32.totalorder 2, %s15
      // Predicated region
      $region41: #{tpu_custom_call.1} parent=5 // pred_check
        %p195 = pneg %p194
      $region42: #{tpu_custom_call.1} parent=5 // pred_check_branch
        %197 = sbr.rel (%p195) target = $region44
      $region43: #{tpu_custom_call.1} parent=5 // pred_region
        %s198 = ssub.s32 %s15, 2
        // Predicated region
        $region45: #{tpu_custom_call.1} parent=43 // pred_check
          %p199 = pneg %p91
        $region46: #{tpu_custom_call.1} parent=43 // pred_check_branch
          %201 = sbr.rel (%p199) target = $region48
        $region47: #{tpu_custom_call.1} parent=43 // pred_region
          %s202 = sand.u32 %s76, 1
          %s203 = scalar_lea.sflag [#allocation4], %s202
          %s204 = sand.u32 %s76, 1
          %s205 = smul.addr %s204, 8
          %s206 = scalar_lea.vmem [#allocation7], %s205
          %207 = dma.done %s203, 128
        $region48: #{tpu_custom_call.1} parent=43 // pred_fallthru
          _
      $region44: #{tpu_custom_call.1} parent=5 // pred_fallthru
        _
    $region6: #{tpu_custom_call.1} parent=1 // loop_footer
      %s19 = sadd.s32 1, %s15
    $region7: #{tpu_custom_call.1} parent=1 // loop_footer_branch
      %14 = sbr.rel target = $region3
    $region8: #{tpu_custom_call.1} parent=1 // loop_exit
      _
    %208 = vsyncpa [#allocation3], 1
    %s209 = scalar_lea.sflag [#allocation3], 1
    %210 = vsyncpa %s209, 1
    %211 = vsyncpa [#allocation6], 1
    %s212 = scalar_lea.sflag [#allocation6], 1
    %213 = vsyncpa %s212, 1
    %214 = vsyncpa [#allocation4], 1
    %s215 = scalar_lea.sflag [#allocation4], 1
    %216 = vsyncpa %s215, 1

// kernel: tpu_custom_call.1
$region0: #{tpu_custom_call.1}
  #allocation0 [shape = 'u32[]', space=smem, size = 0x4, offset = 0x4, fixed_abs, tag = 'smem constant byte address 0x4 - core index']
  #allocation1 [shape = 'u32[144,128]{1,0:T(1,128)}', space=vmem, size = 0x12000, scoped, tag = 'internal scratch']
  %s0 = inlined_call_operand.hbm [shape: f32[32,128], index: 0, kind: input, shape index: {}]
  %s1 = inlined_call_operand.vmem [shape: f32[1,128], index: 1, kind: input, shape index: {}]
  %s2 = inlined_call_operand.vmem [shape: f32[1,128], index: 2, kind: input, shape index: {}]
  %s3 = inlined_call_operand.hbm [shape: f32[128,256], index: 3, kind: input, shape index: {}]
  %s4 = inlined_call_operand.hbm [shape: f32[128,256], index: 4, kind: input, shape index: {}]
  %s5 = inlined_call_operand.hbm [shape: f32[32,256], index: 5, kind: output, shape index: {0}]
  %s6 = inlined_call_operand.hbm [shape: f32[32,256], index: 6, kind: output, shape index: {1}]
  %7 = xla_tuple %s5, %s6
  %s8 = sld [smem:[#allocation0]]
  $region50: #{tpu_custom_call.1} parent=0
    _
  %s10 = ssub.s32 1, %s8
  %s11 = scalar_select 0, %s10, %s8
  $region1: #{tpu_custom_call.1} parent=0
    #allocation2 [shape = 'u8[16384]{0}', space=vmem, size = 0x4000, scoped, tag = 'input window, operand 0, single buffered']
    #allocation3 [shape = 's32[1]{0}', space=sflag, size = 0x4, scoped, tag = 'scoped memory for tpu_custom_call.1']
    #allocation4 [shape = 's32[1]{0}', space=sflag, size = 0x4, scoped, tag = 'scoped memory for tpu_custom_call.1']
    #allocation5 [shape = 'u8[131072]{0}', space=vmem, size = 0x20000, scoped, tag = 'input window, operand 3, single buffered']
    #allocation6 [shape = 's32[1]{0}', space=sflag, size = 0x4, scoped, tag = 'scoped memory for tpu_custom_call.1']
    #allocation7 [shape = 'u8[131072]{0}', space=vmem, size = 0x20000, scoped, tag = 'input window, operand 4, single buffered']
    #allocation8 [shape = 'u8[32768]{0}', space=vmem, size = 0x8000, scoped, tag = 'output window, operand 0, single buffered']
    #allocation9 [shape = 'u8[32768]{0}', space=vmem, size = 0x8000, scoped, tag = 'output window, operand 1, single buffered']
    #allocation10 [shape = 's32[1]{0}', space=sflag, size = 0x4, scoped, tag = 'scoped memory for tpu_custom_call.1']
    %12 = vsyncpa [#allocation3], 0
    %13 = vsyncpa [#allocation6], 0
    %14 = vsyncpa [#allocation4], 0
    %15 = vsyncpa [#allocation10], 0
    // Predicated region
    $region2: #{tpu_custom_call.1} parent=1 // pred_check
      _
    $region3: #{tpu_custom_call.1} parent=1 // pred_check_branch
      %17 = sbr.rel (0) target = $region5
    $region4: #{tpu_custom_call.1} parent=1 // pred_region
      %s19 = ssub.s32 512, 512
      %20 = vsyncadd [#allocation3], %s19
      %s21 = sshll.u32 [#allocation2], 4
      %s22 = int_to_ptr.vmem [resolvable:$true] %s21
      %27 = dma.hbm_to_vmem [thread:$0]  %s0, 512, %s22, [#allocation3], 128, 128, 8
    $region5: #{tpu_custom_call.1} parent=1 // pred_fallthru
      _
    // Predicated region
    $region6: #{tpu_custom_call.1} parent=1 // pred_check
      _
    $region7: #{tpu_custom_call.1} parent=1 // pred_check_branch
      %29 = sbr.rel (0) target = $region9
    $region8: #{tpu_custom_call.1} parent=1 // pred_region
      _
    $region9: #{tpu_custom_call.1} parent=1 // pred_fallthru
      _
    // Predicated region
    $region10: #{tpu_custom_call.1} parent=1 // pred_check
      _
    $region11: #{tpu_custom_call.1} parent=1 // pred_check_branch
      %31 = sbr.rel (0) target = $region13
    $region12: #{tpu_custom_call.1} parent=1 // pred_region
      _
    $region13: #{tpu_custom_call.1} parent=1 // pred_fallthru
      _
    // Predicated region
    $region14: #{tpu_custom_call.1} parent=1 // pred_check
      _
    $region15: #{tpu_custom_call.1} parent=1 // pred_check_branch
      %33 = sbr.rel (0) target = $region17
    $region16: #{tpu_custom_call.1} parent=1 // pred_region
      %s35 = ssub.s32 4096, 4096
      %36 = vsyncadd [#allocation6], %s35
      %s37 = sshll.u32 [#allocation5], 4
      %s38 = int_to_ptr.vmem [resolvable:$true] %s37
      %43 = dma.hbm_to_vmem [thread:$0]  %s3, 4096, %s38, [#allocation6], 256, 256, 16
    $region17: #{tpu_custom_call.1} parent=1 // pred_fallthru
      _
    // Predicated region
    $region18: #{tpu_custom_call.1} parent=1 // pred_check
      _
    $region19: #{tpu_custom_call.1} parent=1 // pred_check_branch
      %45 = sbr.rel (0) target = $region21
    $region20: #{tpu_custom_call.1} parent=1 // pred_region
      %s47 = ssub.s32 4096, 4096
      %48 = vsyncadd [#allocation6], %s47
      %s49 = sshll.u32 [#allocation7], 4
      %s50 = int_to_ptr.vmem [resolvable:$true] %s49
      %55 = dma.hbm_to_vmem [thread:$0]  %s4, 4096, %s50, [#allocation6], 256, 256, 16
    $region21: #{tpu_custom_call.1} parent=1 // pred_fallthru
      _
    // Predicated region
    $region22: #{tpu_custom_call.1} parent=1 // pred_check
      _
    $region23: #{tpu_custom_call.1} parent=1 // pred_check_branch
      %57 = sbr.rel (0) target = $region25
    $region24: #{tpu_custom_call.1} parent=1 // pred_region
      %58 = dma.done [#allocation3], 512
    $region25: #{tpu_custom_call.1} parent=1 // pred_fallthru
      _
    // Predicated region
    $region26: #{tpu_custom_call.1} parent=1 // pred_check
      _
    $region27: #{tpu_custom_call.1} parent=1 // pred_check_branch
      %60 = sbr.rel (0) target = $region29
    $region28: #{tpu_custom_call.1} parent=1 // pred_region
      %61 = dma.done [#allocation6], 4096
    $region29: #{tpu_custom_call.1} parent=1 // pred_fallthru
      _
    // Predicated region
    $region30: #{tpu_custom_call.1} parent=1 // pred_check
      _
    $region31: #{tpu_custom_call.1} parent=1 // pred_check_branch
      %63 = sbr.rel (0) target = $region33
    $region32: #{tpu_custom_call.1} parent=1 // pred_region
      %64 = dma.done [#allocation6], 4096
    $region33: #{tpu_custom_call.1} parent=1 // pred_fallthru
      _
    %v65 = vld [vmem:[#allocation2] sm:$0xff]
    %v66 = vld [vmem:[#allocation2 + $0x8] sm:$0xff]
    %v67 = vld [vmem:[#allocation2 + $0x10] sm:$0xff]
    %v68 = vld [vmem:[#allocation2 + $0x18] sm:$0xff]
    %69 = vadd.xlane.f32.xlu0 %v65
    %v70 = vpop.xlane.xlu0 %69
    %71 = vadd.xlane.f32.xlu0 %v66
    %v72 = vpop.xlane.xlu0 %71
    %73 = vadd.xlane.f32.xlu0 %v67
    %v74 = vpop.xlane.xlu0 %73
    %75 = vadd.xlane.f32.xlu0 %v68
    %v76 = vpop.xlane.xlu0 %75
    %v77 = vrcp.pop 128.0
    %v78 = vmul.f32 %v70, %v77
    %v79 = vmul.f32 %v72, %v77
    %v80 = vmul.f32 %v74, %v77
    %v81 = vmul.f32 %v76, %v77
    %v82 = vsub.f32 %v65, %v78
    %v83 = vsub.f32 %v66, %v79
    %v84 = vsub.f32 %v67, %v80
    %v85 = vsub.f32 %v68, %v81
    %v86 = vmul.f32 %v82, %v82
    %v87 = vmul.f32 %v83, %v83
    %v88 = vmul.f32 %v84, %v84
    %v89 = vmul.f32 %v85, %v85
    %90 = vadd.xlane.f32.xlu0 %v86
    %v91 = vpop.xlane.xlu0 %90
    %92 = vadd.xlane.f32.xlu0 %v87
    %v93 = vpop.xlane.xlu0 %92
    %94 = vadd.xlane.f32.xlu0 %v88
    %v95 = vpop.xlane.xlu0 %94
    %96 = vadd.xlane.f32.xlu0 %v89
    %v97 = vpop.xlane.xlu0 %96
    %v98 = vmul.f32 %v91, %v77
    %v99 = vmul.f32 %v93, %v77
    %v100 = vmul.f32 %v95, %v77
    %v101 = vmul.f32 %v97, %v77
    %v102 = vadd.f32 %v98, 1e-06
    %v103 = vadd.f32 %v99, 1e-06
    %v104 = vadd.f32 %v100, 1e-06
    %v105 = vadd.f32 %v101, 1e-06
    %v106 = vrsqrt.pop %v102
    %v107 = vrsqrt.pop %v103
    %v108 = vrsqrt.pop %v104
    %v109 = vrsqrt.pop %v105
    %v110 = vmul.f32 %v82, %v106
    %v111 = vmul.f32 %v83, %v107
    %v112 = vmul.f32 %v84, %v108
    %v113 = vmul.f32 %v85, %v109
    %v114 = vld [vmem:[%s1] sm:$0x1]
    %v116 = vlaneseq
    %v117 = vshrl.u32 %v116, 7
    %v118 = vsub.s32 0, %v117
    %v119 = vrot.slane %v114, %v118
    %v121 = vmul.f32 %v110, %v119
    %v122 = vmul.f32 %v111, %v119
    %v123 = vmul.f32 %v112, %v119
    %v124 = vmul.f32 %v113, %v119
    %v125 = vld [vmem:[%s2] sm:$0x1]
    %v127 = vlaneseq
    %v128 = vshrl.u32 %v127, 7
    %v129 = vsub.s32 0, %v128
    %v130 = vrot.slane %v125, %v129
    %v132 = vadd.f32 %v121, %v130
    %v133 = vadd.f32 %v122, %v130
    %v134 = vadd.f32 %v123, %v130
    %v135 = vadd.f32 %v124, %v130
    %v136 = vld [vmem:[#allocation5] sm:$0xff]
    %v137 = vld [vmem:[#allocation5 + $0x8] sm:$0xff]
    %v138 = vld [vmem:[#allocation5 + $0x10] sm:$0xff]
    %v139 = vld [vmem:[#allocation5 + $0x18] sm:$0xff]
    %v140 = vld [vmem:[#allocation5 + $0x20] sm:$0xff]
    %v141 = vld [vmem:[#allocation5 + $0x28] sm:$0xff]
    %v142 = vld [vmem:[#allocation5 + $0x30] sm:$0xff]
    %v143 = vld [vmem:[#allocation5 + $0x38] sm:$0xff]
    %v144 = vld [vmem:[#allocation5 + $0x40] sm:$0xff]
    %v145 = vld [vmem:[#allocation5 + $0x48] sm:$0xff]
    %v146 = vld [vmem:[#allocation5 + $0x50] sm:$0xff]
    %v147 = vld [vmem:[#allocation5 + $0x58] sm:$0xff]
    %v148 = vld [vmem:[#allocation5 + $0x60] sm:$0xff]
    %v149 = vld [vmem:[#allocation5 + $0x68] sm:$0xff]
    %v150 = vld [vmem:[#allocation5 + $0x70] sm:$0xff]
    %v151 = vld [vmem:[#allocation5 + $0x78] sm:$0xff]
    %v152 = vld [vmem:[#allocation5 + $0x80] sm:$0xff]
    %v153 = vld [vmem:[#allocation5 + $0x88] sm:$0xff]
    %v154 = vld [vmem:[#allocation5 + $0x90] sm:$0xff]
    %v155 = vld [vmem:[#allocation5 + $0x98] sm:$0xff]
    %v156 = vld [vmem:[#allocation5 + $0xa0] sm:$0xff]
    %v157 = vld [vmem:[#allocation5 + $0xa8] sm:$0xff]
    %v158 = vld [vmem:[#allocation5 + $0xb0] sm:$0xff]
    %v159 = vld [vmem:[#allocation5 + $0xb8] sm:$0xff]
    %v160 = vld [vmem:[#allocation5 + $0xc0] sm:$0xff]
    %v161 = vld [vmem:[#allocation5 + $0xc8] sm:$0xff]
    %v162 = vld [vmem:[#allocation5 + $0xd0] sm:$0xff]
    %v163 = vld [vmem:[#allocation5 + $0xd8] sm:$0xff]
    %v164 = vld [vmem:[#allocation5 + $0xe0] sm:$0xff]
    %v165 = vld [vmem:[#allocation5 + $0xe8] sm:$0xff]
    %v166 = vld [vmem:[#allocation5 + $0xf0] sm:$0xff]
    %v167 = vld [vmem:[#allocation5 + $0xf8] sm:$0xff]
    %168 = vmatprep.subr.mxu0 %v137
    %169 = vmatpush1.msra.mxu0 %v136
    %170 = vmatprep.subr.mxu0 %v139
    %171 = vmatpush1.msra.mxu0 %v138
    %172 = vmatprep.subr.mxu0 %v141
    %173 = vmatpush1.msra.mxu0 %v140
    %174 = vmatprep.subr.mxu0 %v143
    %175 = vmatpush1.msra.mxu0 %v142
    %176 = vmatprep.subr.mxu0 %v145
    %177 = vmatpush1.msra.mxu0 %v144
    %178 = vmatprep.subr.mxu0 %v147
    %179 = vmatpush1.msra.mxu0 %v146
    %180 = vmatprep.subr.mxu0 %v149
    %181 = vmatpush1.msra.mxu0 %v148
    %182 = vmatprep.subr.mxu0 %v151
    %183 = vmatpush1.msra.mxu0 %v150
    %184 = vmatprep.subr.mxu0 %v153
    %185 = vmatpush1.msra.mxu0 %v152
    %186 = vmatprep.subr.mxu0 %v155
    %187 = vmatpush1.msra.mxu0 %v154
    %188 = vmatprep.subr.mxu0 %v157
    %189 = vmatpush1.msra.mxu0 %v156
    %190 = vmatprep.subr.mxu0 %v159
    %191 = vmatpush1.msra.mxu0 %v158
    %192 = vmatprep.subr.mxu0 %v161
    %193 = vmatpush1.msra.mxu0 %v160
    %194 = vmatprep.subr.mxu0 %v163
    %195 = vmatpush1.msra.mxu0 %v162
    %196 = vmatprep.subr.mxu0 %v165
    %197 = vmatpush1.msra.mxu0 %v164
    %198 = vmatprep.subr.mxu0 %v167
    %199 = vmatpush1.msra.mxu0 %v166
    %200 = vmatprep.subr.mxu0 0.0
    %201 = vmatpush1.msra.mxu0 0.0
    %202 = vmatprep.subr.mxu0 0.0
    %203 = vmatpush1.msra.mxu0 0.0
    %204 = vmatprep.subr.mxu0 0.0
    %205 = vmatpush1.msra.mxu0 0.0
    %206 = vmatprep.subr.mxu0 0.0
    %207 = vmatpush1.msra.mxu0 0.0
    %208 = vmatprep.subr.mxu0 0.0
    %209 = vmatpush1.msra.mxu0 0.0
    %210 = vmatprep.subr.mxu0 0.0
    %211 = vmatpush1.msra.mxu0 0.0
    %212 = vmatprep.subr.mxu0 0.0
    %213 = vmatpush1.msra.mxu0 0.0
    %214 = vmatprep.subr.mxu0 0.0
    %215 = vmatpush1.msra.mxu0 0.0
    %216 = vmatprep.subr.mxu0 0.0
    %217 = vmatpush1.msra.mxu0 0.0
    %218 = vmatprep.subr.mxu0 0.0
    %219 = vmatpush1.msra.mxu0 0.0
    %220 = vmatprep.subr.mxu0 0.0
    %221 = vmatpush1.msra.mxu0 0.0
    %222 = vmatprep.subr.mxu0 0.0
    %223 = vmatpush1.msra.mxu0 0.0
    %224 = vmatprep.subr.mxu0 0.0
    %225 = vmatpush1.msra.mxu0 0.0
    %226 = vmatprep.subr.mxu0 0.0
    %227 = vmatpush1.msra.mxu0 0.0
    %228 = vmatprep.subr.mxu0 0.0
    %229 = vmatpush1.msra.mxu0 0.0
    %230 = vmatprep.subr.mxu0 0.0
    %231 = vmatpush1.msra.mxu0 0.0
    %232 = vmatprep.mubr.f32.mxu0 0.0
    %233 = vmatmul.mubr.f32.gmra.mrb[0].mxu0 %v132
    %v234 = vpop.f32.mrb[0].mxu0
    %v235 = vadd.f32 0.0, %v234
    %v236 = vpop.f32.mrb[0].mxu0
    %v237 = vadd.f32 0.0, %v236
    %238 = vmatprep.mubr.f32.mxu0 0.0
    %239 = vmatmul.mubr.f32.gmra.mrb[0].mxu0 %v133
    %v240 = vpop.f32.mrb[0].mxu0
    %v241 = vadd.f32 0.0, %v240
    %v242 = vpop.f32.mrb[0].mxu0
    %v243 = vadd.f32 0.0, %v242
    %244 = vmatprep.mubr.f32.mxu0 0.0
    %245 = vmatmul.mubr.f32.gmra.mrb[0].mxu0 %v134
    %v246 = vpop.f32.mrb[0].mxu0
    %v247 = vadd.f32 0.0, %v246
    %v248 = vpop.f32.mrb[0].mxu0
    %v249 = vadd.f32 0.0, %v248
    %250 = vmatprep.mubr.f32.mxu0 0.0
    %251 = vmatmul.mubr.f32.gmra.mrb[0].mxu0 %v135
    %v252 = vpop.f32.mrb[0].mxu0
    %v253 = vadd.f32 0.0, %v252
    %v254 = vpop.f32.mrb[0].mxu0
    %v255 = vadd.f32 0.0, %v254
    %256 = vdwg.mxu0
    %257 = vst [vmem:[#allocation8] sm:$0xff] %v235
    %258 = vst [vmem:[#allocation8 + $0x8] sm:$0xff] %v237
    %259 = vst [vmem:[#allocation8 + $0x10] sm:$0xff] %v241
    %260 = vst [vmem:[#allocation8 + $0x18] sm:$0xff] %v243
    %261 = vst [vmem:[#allocation8 + $0x20] sm:$0xff] %v247
    %262 = vst [vmem:[#allocation8 + $0x28] sm:$0xff] %v249
    %263 = vst [vmem:[#allocation8 + $0x30] sm:$0xff] %v253
    %264 = vst [vmem:[#allocation8 + $0x38] sm:$0xff] %v255
    %v265 = vld [vmem:[#allocation7] sm:$0xff]
    %v266 = vld [vmem:[#allocation7 + $0x8] sm:$0xff]
    %v267 = vld [vmem:[#allocation7 + $0x10] sm:$0xff]
    %v268 = vld [vmem:[#allocation7 + $0x18] sm:$0xff]
    %v269 = vld [vmem:[#allocation7 + $0x20] sm:$0xff]
    %v270 = vld [vmem:[#allocation7 + $0x28] sm:$0xff]
    %v271 = vld [vmem:[#allocation7 + $0x30] sm:$0xff]
    %v272 = vld [vmem:[#allocation7 + $0x38] sm:$0xff]
    %v273 = vld [vmem:[#allocation7 + $0x40] sm:$0xff]
    %v274 = vld [vmem:[#allocation7 + $0x48] sm:$0xff]
    %v275 = vld [vmem:[#allocation7 + $0x50] sm:$0xff]
    %v276 = vld [vmem:[#allocation7 + $0x58] sm:$0xff]
    %v277 = vld [vmem:[#allocation7 + $0x60] sm:$0xff]
    %v278 = vld [vmem:[#allocation7 + $0x68] sm:$0xff]
    %v279 = vld [vmem:[#allocation7 + $0x70] sm:$0xff]
    %v280 = vld [vmem:[#allocation7 + $0x78] sm:$0xff]
    %v281 = vld [vmem:[#allocation7 + $0x80] sm:$0xff]
    %v282 = vld [vmem:[#allocation7 + $0x88] sm:$0xff]
    %v283 = vld [vmem:[#allocation7 + $0x90] sm:$0xff]
    %v284 = vld [vmem:[#allocation7 + $0x98] sm:$0xff]
    %v285 = vld [vmem:[#allocation7 + $0xa0] sm:$0xff]
    %v286 = vld [vmem:[#allocation7 + $0xa8] sm:$0xff]
    %v287 = vld [vmem:[#allocation7 + $0xb0] sm:$0xff]
    %v288 = vld [vmem:[#allocation7 + $0xb8] sm:$0xff]
    %v289 = vld [vmem:[#allocation7 + $0xc0] sm:$0xff]
    %v290 = vld [vmem:[#allocation7 + $0xc8] sm:$0xff]
    %v291 = vld [vmem:[#allocation7 + $0xd0] sm:$0xff]
    %v292 = vld [vmem:[#allocation7 + $0xd8] sm:$0xff]
    %v293 = vld [vmem:[#allocation7 + $0xe0] sm:$0xff]
    %v294 = vld [vmem:[#allocation7 + $0xe8] sm:$0xff]
    %v295 = vld [vmem:[#allocation7 + $0xf0] sm:$0xff]
    %v296 = vld [vmem:[#allocation7 + $0xf8] sm:$0xff]
    %297 = vmatprep.subr.mxu0 %v266
    %298 = vmatpush1.msra.mxu0 %v265
    %299 = vmatprep.subr.mxu0 %v268
    %300 = vmatpush1.msra.mxu0 %v267
    %301 = vmatprep.subr.mxu0 %v270
    %302 = vmatpush1.msra.mxu0 %v269
    %303 = vmatprep.subr.mxu0 %v272
    %304 = vmatpush1.msra.mxu0 %v271
    %305 = vmatprep.subr.mxu0 %v274
    %306 = vmatpush1.msra.mxu0 %v273
    %307 = vmatprep.subr.mxu0 %v276
    %308 = vmatpush1.msra.mxu0 %v275
    %309 = vmatprep.subr.mxu0 %v278
    %310 = vmatpush1.msra.mxu0 %v277
    %311 = vmatprep.subr.mxu0 %v280
    %312 = vmatpush1.msra.mxu0 %v279
    %313 = vmatprep.subr.mxu0 %v282
    %314 = vmatpush1.msra.mxu0 %v281
    %315 = vmatprep.subr.mxu0 %v284
    %316 = vmatpush1.msra.mxu0 %v283
    %317 = vmatprep.subr.mxu0 %v286
    %318 = vmatpush1.msra.mxu0 %v285
    %319 = vmatprep.subr.mxu0 %v288
    %320 = vmatpush1.msra.mxu0 %v287
    %321 = vmatprep.subr.mxu0 %v290
    %322 = vmatpush1.msra.mxu0 %v289
    %323 = vmatprep.subr.mxu0 %v292
    %324 = vmatpush1.msra.mxu0 %v291
    %325 = vmatprep.subr.mxu0 %v294
    %326 = vmatpush1.msra.mxu0 %v293
    %327 = vmatprep.subr.mxu0 %v296
    %328 = vmatpush1.msra.mxu0 %v295
    %329 = vmatprep.subr.mxu0 0.0
    %330 = vmatpush1.msra.mxu0 0.0
    %331 = vmatprep.subr.mxu0 0.0
    %332 = vmatpush1.msra.mxu0 0.0
    %333 = vmatprep.subr.mxu0 0.0
    %334 = vmatpush1.msra.mxu0 0.0
    %335 = vmatprep.subr.mxu0 0.0
    %336 = vmatpush1.msra.mxu0 0.0
    %337 = vmatprep.subr.mxu0 0.0
    %338 = vmatpush1.msra.mxu0 0.0
    %339 = vmatprep.subr.mxu0 0.0
    %340 = vmatpush1.msra.mxu0 0.0
    %341 = vmatprep.subr.mxu0 0.0
    %342 = vmatpush1.msra.mxu0 0.0
    %343 = vmatprep.subr.mxu0 0.0
    %344 = vmatpush1.msra.mxu0 0.0
    %345 = vmatprep.subr.mxu0 0.0
    %346 = vmatpush1.msra.mxu0 0.0
    %347 = vmatprep.subr.mxu0 0.0
    %348 = vmatpush1.msra.mxu0 0.0
    %349 = vmatprep.subr.mxu0 0.0
    %350 = vmatpush1.msra.mxu0 0.0
    %351 = vmatprep.subr.mxu0 0.0
    %352 = vmatpush1.msra.mxu0 0.0
    %353 = vmatprep.subr.mxu0 0.0
    %354 = vmatpush1.msra.mxu0 0.0
    %355 = vmatprep.subr.mxu0 0.0
    %356 = vmatpush1.msra.mxu0 0.0
    %357 = vmatprep.subr.mxu0 0.0
    %358 = vmatpush1.msra.mxu0 0.0
    %359 = vmatprep.subr.mxu0 0.0
    %360 = vmatpush1.msra.mxu0 0.0
    %361 = vmatprep.mubr.f32.mxu0 0.0
    %362 = vmatmul.mubr.f32.gmra.mrb[0].mxu0 %v132
    %v363 = vpop.f32.mrb[0].mxu0
    %v364 = vadd.f32 0.0, %v363
    %v365 = vpop.f32.mrb[0].mxu0
    %v366 = vadd.f32 0.0, %v365
    %367 = vmatprep.mubr.f32.mxu0 0.0
    %368 = vmatmul.mubr.f32.gmra.mrb[0].mxu0 %v133
    %v369 = vpop.f32.mrb[0].mxu0
    %v370 = vadd.f32 0.0, %v369
    %v371 = vpop.f32.mrb[0].mxu0
    %v372 = vadd.f32 0.0, %v371
    %373 = vmatprep.mubr.f32.mxu0 0.0
    %374 = vmatmul.mubr.f32.gmra.mrb[0].mxu0 %v134
    %v375 = vpop.f32.mrb[0].mxu0
    %v376 = vadd.f32 0.0, %v375
    %v377 = vpop.f32.mrb[0].mxu0
    %v378 = vadd.f32 0.0, %v377
    %379 = vmatprep.mubr.f32.mxu0 0.0
    %380 = vmatmul.mubr.f32.gmra.mrb[0].mxu0 %v135
    %v381 = vpop.f32.mrb[0].mxu0
    %v382 = vadd.f32 0.0, %v381
    %v383 = vpop.f32.mrb[0].mxu0
    %v384 = vadd.f32 0.0, %v383
    %385 = vdwg.mxu0
    %386 = vst [vmem:[#allocation9] sm:$0xff] %v364
    %387 = vst [vmem:[#allocation9 + $0x8] sm:$0xff] %v366
    %388 = vst [vmem:[#allocation9 + $0x10] sm:$0xff] %v370
    %389 = vst [vmem:[#allocation9 + $0x18] sm:$0xff] %v372
    %390 = vst [vmem:[#allocation9 + $0x20] sm:$0xff] %v376
    %391 = vst [vmem:[#allocation9 + $0x28] sm:$0xff] %v378
    %392 = vst [vmem:[#allocation9 + $0x30] sm:$0xff] %v382
    %393 = vst [vmem:[#allocation9 + $0x38] sm:$0xff] %v384
    // Predicated region
    $region34: #{tpu_custom_call.1} parent=1 // pred_check
      _
    $region35: #{tpu_custom_call.1} parent=1 // pred_check_branch
      %395 = sbr.rel (0) target = $region37
    $region36: #{tpu_custom_call.1} parent=1 // pred_region
      %s397 = ssub.s32 1024, 1024
      %398 = vsyncadd [#allocation4], %s397
      %s399 = sshll.u32 [#allocation8], 4
      %s400 = int_to_ptr.vmem [resolvable:$true] %s399
      %405 = dma.vmem_to_hbm [thread:$0]  %s400, 1024, %s5, [#allocation4], 256, 256, 16
    $region37: #{tpu_custom_call.1} parent=1 // pred_fallthru
      _
    // Predicated region
    $region38: #{tpu_custom_call.1} parent=1 // pred_check
      _
    $region39: #{tpu_custom_call.1} parent=1 // pred_check_branch
      %407 = sbr.rel (0) target = $region41
    $region40: #{tpu_custom_call.1} parent=1 // pred_region
      %s409 = ssub.s32 1024, 1024
      %410 = vsyncadd [#allocation10], %s409
      %s411 = sshll.u32 [#allocation9], 4
      %s412 = int_to_ptr.vmem [resolvable:$true] %s411
      %417 = dma.vmem_to_hbm [thread:$0]  %s412, 1024, %s6, [#allocation10], 256, 256, 16
    $region41: #{tpu_custom_call.1} parent=1 // pred_fallthru
      _
    // Predicated region
    $region42: #{tpu_custom_call.1} parent=1 // pred_check
      _
    $region43: #{tpu_custom_call.1} parent=1 // pred_check_branch
      %419 = sbr.rel (0) target = $region45
    $region44: #{tpu_custom_call.1} parent=1 // pred_region
      %420 = dma.done [#allocation4], 1024
    $region45: #{tpu_custom_call.1} parent=1 // pred_fallthru
      _
    // Predicated region
    $region46: #{tpu_custom_call.1} parent=1 // pred_check
      _
    $region47: #{tpu_custom_call.1} parent=1 // pred_check_branch
      %422 = sbr.rel (0) target = $region49
    $region48: #{tpu_custom_call.1} parent=1 // pred_region
      %423 = dma.done [#allocation10], 1024
    $region49: #{tpu_custom_call.1} parent=1 // pred_fallthru
      _
    %424 = vsyncpa [#allocation3], 1
    %425 = vsyncpa [#allocation6], 1
    %426 = vsyncpa [#allocation4], 1
    %427 = vsyncpa [#allocation10], 1

</llo_original>
